<compile_context>
chip_gen: v7x
topology: tpu7x:2x2x1
jax: 0.10.0
libtpu: 0.0.40
codegen_flags: <defaults>
</compile_context>

<pallas_src>
import math

import jax
import jax.numpy as jnp
from jax.experimental import pallas as pl
from jax.experimental.pallas import tpu as pltpu


_MAX_LANE_TILE = 1024          # lane-axis tile (multiple of 128)
_TARGET_BLOCK_BYTES = 1 << 20  # ~1 MiB of 4-channel input payload per block


def _round_up(x, m):
    return ((x + m - 1) // m) * m


# ----------------------------------------------------------------------------
# Kernel factory: background baked in as scalar constants.
#   out[c] = rgb[c] * alpha + (1 - alpha) * bg[c]
# ----------------------------------------------------------------------------
def _make_kernel(background):
    bg_r, bg_g, bg_b = background

    def kernel(img_ref, out_ref):
        # img_ref block: (1, 4, TS, TL); out_ref block: (1, 3, TS, TL).
        alpha = img_ref[0, 3].astype(jnp.float32)          # (TS, TL)
        one_minus_a = 1.0 - alpha
        for c, bg_c in enumerate((bg_r, bg_g, bg_b)):      # unrolled at trace
            rgb_c = img_ref[0, c].astype(jnp.float32)      # (TS, TL)
            out_ref[0, c] = (rgb_c * alpha + one_minus_a * bg_c).astype(
                out_ref.dtype)

    return kernel


# ----------------------------------------------------------------------------
# Tiling helpers
# ----------------------------------------------------------------------------
def _spatial_view(H, W):
    """Pick a lane-dense 2-D factorization (rows, cols) of the spatial plane.

    Prefers cols to be a multiple of 128 (dense lane groups). Falls back to
    the natural (H, W) when no free re-factorization exists.
    """
    if W % 128 == 0:
        return H, W
    HW = H * W
    if HW % 128 == 0:
        cols = (min(_MAX_LANE_TILE, HW) // 128) * 128
        while cols >= 128:
            if HW % cols == 0:
                return HW // cols, cols
            cols -= 128
    return H, W


def _choose_tiles(B, rows, cols, itemsize):
    """Pick (sublane tile, lane tile) for the spatial block."""
    # Lane tile: full extent if small (always legal), else a 128-multiple tile
    # (partial edge blocks are handled by the grid).
    tl = cols if cols <= _MAX_LANE_TILE else _MAX_LANE_TILE
    # Sublane multiple depends on dtype packing (f32: 8, bf16: 16, int8: 32).
    sub = max(8, 32 // itemsize)
    if rows <= sub:
        return rows, tl
    ts = _TARGET_BLOCK_BYTES // (4 * tl * itemsize)
    ts = max(sub, (ts // sub) * sub)
    ts = min(ts, _round_up(rows, sub))
    # Guarantee >= 2 spatial grid steps when batch == 1 so double-buffering
    # can overlap DMA and both v7x TensorCores get work.
    if B == 1 and ts >= rows and cols <= tl:
        ts = max(sub, _round_up(-(-rows // 2), sub))
    return ts, tl


# ----------------------------------------------------------------------------
# pallas_call wrapper
# ----------------------------------------------------------------------------
def _composite_pallas(img, bg_vals):
    """img: (B, 4, rows, cols); bg_vals: 3-tuple of Python floats."""
    B, _, R, L = img.shape
    itemsize = jnp.dtype(img.dtype).itemsize
    ts, tl = _choose_tiles(B, R, L, itemsize)
    grid = (B, pl.cdiv(R, ts), pl.cdiv(L, tl))

    cost = pl.CostEstimate(
        flops=4 * B * 3 * R * L,
        transcendentals=0,
        bytes_accessed=B * R * L * (4 + 3) * itemsize,
    )

    return pl.pallas_call(
        _make_kernel(bg_vals),
        out_shape=jax.ShapeDtypeStruct((B, 3, R, L), img.dtype),
        grid_spec=pltpu.PrefetchScalarGridSpec(
            num_scalar_prefetch=0,
            grid=grid,
            in_specs=[
                pl.BlockSpec((1, 4, ts, tl), lambda b, i, j: (b, 0, i, j)),
            ],
            out_specs=pl.BlockSpec((1, 3, ts, tl), lambda b, i, j: (b, 0, i, j)),
        ),
        compiler_params=pltpu.CompilerParams(
            dimension_semantics=("parallel", "parallel", "parallel")),
        cost_estimate=cost,
    )(img)


# ----------------------------------------------------------------------------
# Wrapper reproducing CompositeAlpha.forward semantics.
# ----------------------------------------------------------------------------
def composite_alpha(img, background):
    """img: (..., C, H, W).  background: float or 3-tuple of floats."""
    C = img.shape[-3]
    if C == 3:
        return img                       # no alpha channel: identity
    if C < 4:
        raise ValueError(f"expected >=4 channels (RGBA), got {C}")

    if isinstance(background, (int, float)):
        bg_vals = (float(background),) * 3
    else:
        bg_vals = tuple(float(v) for v in background)
        if len(bg_vals) != 3:
            raise ValueError("background must be a float or a 3-tuple")

    lead = img.shape[:-3]
    H, W = img.shape[-2], img.shape[-1]
    B = math.prod(lead) if lead else 1

    # Drop unused channels so the bandwidth-bound kernel never DMAs them.
    img4 = img[..., :4, :, :] if C > 4 else img

    rows, cols = _spatial_view(H, W)
    img_v = jnp.reshape(img4, (B, 4, rows, cols))   # contiguous -> free
    out = _composite_pallas(img_v, bg_vals)
    return jnp.reshape(out, (*lead, 3, H, W))


# ----------------------------------------------------------------------------
# Self-test
# ----------------------------------------------------------------------------
def _reference(img, background):
    alpha = img[..., 3:4, :, :]
    bg = jnp.asarray(background, jnp.float32).reshape(3, 1, 1)
    return img[..., :3, :, :] * alpha + (1.0 - alpha) * bg


if __name__ == "__main__":
    key = jax.random.PRNGKey(0)
    background = (0.25, 0.5, 0.75)

    # Small RGBA batch: B=2, C=4, H=16, W=16 (lane-dense re-factored view).
    B, C, H, W = 2, 4, 16, 16
    img = jax.random.uniform(key, (B, C, H, W), dtype=jnp.float32)
    out = jax.block_until_ready(composite_alpha(img, background))
    assert out.shape == (B, 3, H, W), out.shape
    ref = _reference(img, background)
    assert bool(jnp.allclose(out, ref, atol=1e-6, rtol=1e-6)), "mismatch (small)"

    # Medium case: W not a multiple of 128, batch of 1 -> natural (H, W)
    # layout, multiple row tiles with a partial edge block.
    k2 = jax.random.PRNGKey(1)
    img_m = jax.random.uniform(k2, (1, 4, 200, 360), dtype=jnp.float32)
    out_m = jax.block_until_ready(composite_alpha(img_m, 0.5))
    assert out_m.shape == (1, 3, 200, 360), out_m.shape
    ref_m = _reference(img_m, (0.5, 0.5, 0.5))
    assert bool(jnp.allclose(out_m, ref_m, atol=1e-6, rtol=1e-6)), "mismatch (tiled)"

    # 3-channel early-return path (identity).
    img_rgb = jax.random.uniform(key, (3, H, W), dtype=jnp.float32)
    out_rgb = jax.block_until_ready(composite_alpha(img_rgb, 0.5))
    assert out_rgb.shape == (3, H, W)
    assert bool(jnp.allclose(out_rgb, img_rgb))

    print("KERNEL_OK")
</pallas_src>

<mosaic_0001>
module attributes {stable_mosaic.version = 11 : i64} {
  func.func @kernel(%arg0: i32, %arg1: i32, %arg2: i32, %arg3: memref<1x4x1x256xf32, #tpu.memory_space<vmem>>, %arg4: memref<1x3x1x256xf32, #tpu.memory_space<vmem>>) attributes {dimension_semantics = [#tpu.dimension_semantics<parallel>, #tpu.dimension_semantics<parallel>, #tpu.dimension_semantics<parallel>], iteration_bounds = array<i64: 2, 1, 1>, scalar_prefetch = 0 : i64, scratch_operands = 0 : i64, tpu.core_type = #tpu.core_type<tc>, window_params = [{transform_indices = @transform_0, window_bounds = array<i64: 1, 4, 1, 256>}, {transform_indices = @transform_1, window_bounds = array<i64: 1, 3, 1, 256>}]} {
    %c0 = arith.constant 0 : index
    %c3 = arith.constant 3 : index
    %c0_0 = arith.constant 0 : index
    %c0_1 = arith.constant 0 : index
    %0 = vector.load %arg3[%c0, %c3, %c0_0, %c0_1] : memref<1x4x1x256xf32, #tpu.memory_space<vmem>>, vector<1x1x1x256xf32>
    %1 = vector.shape_cast %0 : vector<1x1x1x256xf32> to vector<1x256xf32>
    %cst = arith.constant 1.000000e+00 : f32
    %2 = vector.broadcast %cst : f32 to vector<1x256xf32>
    %3 = arith.subf %2, %1 : vector<1x256xf32>
    %c0_2 = arith.constant 0 : index
    %c0_3 = arith.constant 0 : index
    %c0_4 = arith.constant 0 : index
    %c0_5 = arith.constant 0 : index
    %4 = vector.load %arg3[%c0_2, %c0_3, %c0_4, %c0_5] : memref<1x4x1x256xf32, #tpu.memory_space<vmem>>, vector<1x1x1x256xf32>
    %5 = vector.shape_cast %4 : vector<1x1x1x256xf32> to vector<1x256xf32>
    %6 = arith.mulf %5, %1 : vector<1x256xf32>
    %cst_6 = arith.constant 2.500000e-01 : f32
    %7 = vector.broadcast %cst_6 : f32 to vector<1x256xf32>
    %8 = arith.mulf %3, %7 : vector<1x256xf32>
    %9 = arith.addf %6, %8 : vector<1x256xf32>
    %c0_7 = arith.constant 0 : index
    %c0_8 = arith.constant 0 : index
    %c0_9 = arith.constant 0 : index
    %c0_10 = arith.constant 0 : index
    %10 = vector.load %arg4[%c0_7, %c0_8, %c0_9, %c0_10] : memref<1x3x1x256xf32, #tpu.memory_space<vmem>>, vector<1x1x1x256xf32>
    %11 = vector.shape_cast %10 : vector<1x1x1x256xf32> to vector<1x256xf32>
    %12 = vector.shape_cast %9 : vector<1x256xf32> to vector<1x1x1x256xf32>
    tpu.vector_store %arg4[%c0_7, %c0_8, %c0_9, %c0_10], %12 {strides = array<i32>} : memref<1x3x1x256xf32, #tpu.memory_space<vmem>>, vector<1x1x1x256xf32>,
    %c0_11 = arith.constant 0 : index
    %c1 = arith.constant 1 : index
    %c0_12 = arith.constant 0 : index
    %c0_13 = arith.constant 0 : index
    %13 = vector.load %arg3[%c0_11, %c1, %c0_12, %c0_13] : memref<1x4x1x256xf32, #tpu.memory_space<vmem>>, vector<1x1x1x256xf32>
    %14 = vector.shape_cast %13 : vector<1x1x1x256xf32> to vector<1x256xf32>
    %15 = arith.mulf %14, %1 : vector<1x256xf32>
    %cst_14 = arith.constant 5.000000e-01 : f32
    %16 = vector.broadcast %cst_14 : f32 to vector<1x256xf32>
    %17 = arith.mulf %3, %16 : vector<1x256xf32>
    %18 = arith.addf %15, %17 : vector<1x256xf32>
    %c0_15 = arith.constant 0 : index
    %c1_16 = arith.constant 1 : index
    %c0_17 = arith.constant 0 : index
    %c0_18 = arith.constant 0 : index
    %19 = vector.load %arg4[%c0_15, %c1_16, %c0_17, %c0_18] : memref<1x3x1x256xf32, #tpu.memory_space<vmem>>, vector<1x1x1x256xf32>
    %20 = vector.shape_cast %19 : vector<1x1x1x256xf32> to vector<1x256xf32>
    %21 = vector.shape_cast %18 : vector<1x256xf32> to vector<1x1x1x256xf32>
    tpu.vector_store %arg4[%c0_15, %c1_16, %c0_17, %c0_18], %21 {strides = array<i32>} : memref<1x3x1x256xf32, #tpu.memory_space<vmem>>, vector<1x1x1x256xf32>,
    %c0_19 = arith.constant 0 : index
    %c2 = arith.constant 2 : index
    %c0_20 = arith.constant 0 : index
    %c0_21 = arith.constant 0 : index
    %22 = vector.load %arg3[%c0_19, %c2, %c0_20, %c0_21] : memref<1x4x1x256xf32, #tpu.memory_space<vmem>>, vector<1x1x1x256xf32>
    %23 = vector.shape_cast %22 : vector<1x1x1x256xf32> to vector<1x256xf32>
    %24 = arith.mulf %23, %1 : vector<1x256xf32>
    %cst_22 = arith.constant 7.500000e-01 : f32
    %25 = vector.broadcast %cst_22 : f32 to vector<1x256xf32>
    %26 = arith.mulf %3, %25 : vector<1x256xf32>
    %27 = arith.addf %24, %26 : vector<1x256xf32>
    %c0_23 = arith.constant 0 : index
    %c2_24 = arith.constant 2 : index
    %c0_25 = arith.constant 0 : index
    %c0_26 = arith.constant 0 : index
    %28 = vector.load %arg4[%c0_23, %c2_24, %c0_25, %c0_26] : memref<1x3x1x256xf32, #tpu.memory_space<vmem>>, vector<1x1x1x256xf32>
    %29 = vector.shape_cast %28 : vector<1x1x1x256xf32> to vector<1x256xf32>
    %30 = vector.shape_cast %27 : vector<1x256xf32> to vector<1x1x1x256xf32>
    tpu.vector_store %arg4[%c0_23, %c2_24, %c0_25, %c0_26], %30 {strides = array<i32>} : memref<1x3x1x256xf32, #tpu.memory_space<vmem>>, vector<1x1x1x256xf32>,
    return
  }
  func.func @transform_0(%arg0: i32, %arg1: i32, %arg2: i32) -> (i32, i32, i32, i32) {
    %c0_i32 = arith.constant 0 : i32
    %c0_i32_0 = arith.constant 0 : i32
    return %arg0, %c0_i32, %arg1, %arg2 : i32, i32, i32, i32
  }
  func.func @transform_1(%arg0: i32, %arg1: i32, %arg2: i32) -> (i32, i32, i32, i32) {
    %c0_i32 = arith.constant 0 : i32
    %c0_i32_0 = arith.constant 0 : i32
    return %arg0, %c0_i32, %arg1, %arg2 : i32, i32, i32, i32
  }
}

</mosaic_0001>

<llo_original>
// kernel: tpu_custom_call.1
$region0: #{tpu_custom_call.1}
  #allocation0 [shape = 'u32[]', space=smem, size = 0x4, offset = 0x4, fixed_abs, tag = 'smem constant byte address 0x4 - core index']
  #allocation1 [shape = 'u32[144,128]{1,0:T(1,128)}', space=vmem, size = 0x12000, scoped, tag = 'internal scratch']
  %s0 = inlined_call_operand.hbm [shape: f32[2,4,1,256], index: 0, kind: input, shape index: {}]
  %s1 = inlined_call_operand.hbm [shape: f32[2,3,1,256], index: 1, kind: output, shape index: {}]
  %s2 = sld [smem:[#allocation0]]
  $region41: #{tpu_custom_call.1} parent=0
    _
  %s4 = ssub.s32 1, %s2
  %s5 = scalar_select 0, %s4, %s2
  $region1: #{tpu_custom_call.1} parent=0
    #allocation2 [shape = 'u8[8192]{0}', space=vmem, size = 0x2000, scoped, tag = 'input window, operand 0']
    #allocation3 [shape = 's32[2]{0}', space=sflag, size = 0x8, scoped, tag = 'scoped memory for tpu_custom_call.1']
    #allocation4 [shape = 's32[2]{0}', space=sflag, size = 0x8, scoped, tag = 'scoped memory for tpu_custom_call.1']
    #allocation5 [shape = 'u8[6144]{0}', space=vmem, size = 0x1800, scoped, tag = 'output window, operand 0']
    %6 = vsyncpa [#allocation3], 0
    %s7 = scalar_lea.sflag [#allocation3], 1
    %8 = vsyncpa %s7, 0
    %9 = vsyncpa [#allocation4], 0
    %s10 = scalar_lea.sflag [#allocation4], 1
    %11 = vsyncpa %s10, 0
    loop: start=0, step=1, limit=4
    $region2: #{tpu_custom_call.1} parent=1 // loop_pre_header
      _
    $region3: #{tpu_custom_call.1} parent=1 // loop_header
      %s13 = sphi 0, %s17
      %p14 = scmp.ge.s32.totalorder %s13, 4
      %s20 = sphi 0, %s39
      %s21 = sphi 0, %s35
      %s22 = sphi 0, %s31
      %s23 = sphi 0, %s20
      %s24 = sphi 0, %s21
      %s25 = sphi 0, %s22
      %s26 = sphi 0, %s23
      %s27 = sphi 0, %s24
      %s28 = sphi 0, %s25
      %s46 = sphi 0, %s48
      %s49 = sphi 0, %s46
      %s50 = sphi 0, %s49
      %s66 = sphi 0, %s50
      %s76 = sphi 0, %s78
      %s79 = sphi 0, %s76
      %s80 = sphi 0, %s79
      %s96 = sphi 0, %s80
    $region4: #{tpu_custom_call.1} parent=1 // loop_header_branch
      %16 = sbr.rel (%p14) target = $region8
    $region5: #{tpu_custom_call.1} parent=1 // loop_body
      %s18 = ssub.s32 %s13, 1
      %s19 = ssub.s32 %s13, 2
      %s29 = sadd.s32 1, %s22
      %p30 = scmp.ge.s32.totalorder %s29, 1
      %s31 = scalar_select %p30, 0, %s29
      %s32 = sadd.s32 1, %s21
      %s33 = scalar_select %p30, %s32, %s21
      %p34 = scmp.ge.s32.totalorder %s33, 1
      %s35 = scalar_select %p34, 0, %s33
      %s36 = sadd.s32 1, %s20
      %s37 = scalar_select %p34, %s36, %s20
      %p38 = scmp.ge.s32.totalorder %s37, 2
      %s39 = scalar_select %p38, 0, %s37
      %s40 = ssub.s32 %s20, %s39
      %s41 = ssub.s32 %s21, %s35
      %s42 = sor.u32 %s40, %s41
      %s43 = ssub.s32 %s22, %s31
      %s44 = sor.u32 %s42, %s43
      %p45 = scmp.eq.s32.totalorder %s44, 0
      %s47 = sadd.s32 %s46, 1
      %s48 = scalar_select %p45, %s46, %s47
      %p51 = pneg %p45
      %p52 = scmp.eq.s32.totalorder %s13, 1
      %p53 = por %p51, %p52
      %p54 = scmp.ne.s32.totalorder %s46, %s49
      %p55 = scmp.eq.s32.totalorder %s13, 0
      %p56 = por %p54, %p55
      %p57 = scmp.ne.s32.totalorder %s46, %s49
      %p58 = scmp.eq.s32.totalorder %s18, 1
      %p59 = por %p57, %p58
      %p60 = scmp.ne.s32.totalorder %s49, %s50
      %p61 = scmp.eq.s32.totalorder %s18, 0
      %p62 = por %p60, %p61
      %p63 = scmp.ne.s32.totalorder %s49, %s50
      %p64 = scmp.eq.s32.totalorder %s19, 1
      %p65 = por %p63, %p64
      %p67 = scmp.ne.s32.totalorder %s50, %s66
      %p68 = scmp.eq.s32.totalorder %s19, 0
      %p69 = por %p67, %p68
      %s70 = ssub.s32 %s20, %s39
      %s71 = ssub.s32 %s21, %s35
      %s72 = sor.u32 %s70, %s71
      %s73 = ssub.s32 %s22, %s31
      %s74 = sor.u32 %s72, %s73
      %p75 = scmp.eq.s32.totalorder %s74, 0
      %s77 = sadd.s32 %s76, 1
      %s78 = scalar_select %p75, %s76, %s77
      %p81 = pneg %p75
      %p82 = scmp.eq.s32.totalorder %s13, 1
      %p83 = por %p81, %p82
      %p84 = scmp.ne.s32.totalorder %s76, %s79
      %p85 = scmp.eq.s32.totalorder %s13, 0
      %p86 = por %p84, %p85
      %p87 = scmp.ne.s32.totalorder %s76, %s79
      %p88 = scmp.eq.s32.totalorder %s18, 1
      %p89 = por %p87, %p88
      %p90 = scmp.ne.s32.totalorder %s79, %s80
      %p91 = scmp.eq.s32.totalorder %s18, 0
      %p92 = por %p90, %p91
      %p93 = scmp.ne.s32.totalorder %s79, %s80
      %p94 = scmp.eq.s32.totalorder %s19, 1
      %p95 = por %p93, %p94
      %p97 = scmp.ne.s32.totalorder %s80, %s96
      %p98 = scmp.eq.s32.totalorder %s19, 0
      %p99 = por %p97, %p98
      %p100 = scmp.le.s32.totalorder 1, %s13
      %p101 = scmp.lt.s32.totalorder %s13, 3
      %p102 = pnand %p100, %p101
      %p103 = pneg %p102
      // Predicated region
      $region9: #{tpu_custom_call.1} parent=5 // pred_check
        _
      $region10: #{tpu_custom_call.1} parent=5 // pred_check_branch
        %105 = sbr.rel (%p102) target = $region12
      $region11: #{tpu_custom_call.1} parent=5 // pred_region
        %s106 = ssub.s32 %s13, 1
      $region12: #{tpu_custom_call.1} parent=5 // pred_fallthru
        _
      %p107 = scmp.lt.s32.totalorder %s13, 2
      // Predicated region
      $region13: #{tpu_custom_call.1} parent=5 // pred_check
        %p108 = pneg %p107
      $region14: #{tpu_custom_call.1} parent=5 // pred_check_branch
        %110 = sbr.rel (%p108) target = $region16
      $region15: #{tpu_custom_call.1} parent=5 // pred_region
        // Predicated region
        $region17: #{tpu_custom_call.1} parent=15 // pred_check
          %p111 = pneg %p56
        $region18: #{tpu_custom_call.1} parent=15 // pred_check_branch
          %113 = sbr.rel (%p111) target = $region20
        $region19: #{tpu_custom_call.1} parent=15 // pred_region
          %s114 = sand.u32 %s46, 1
          %s115 = scalar_lea.sflag [#allocation3], %s114
          %s116 = sand.u32 %s46, 1
          %s117 = smul.addr %s116, 8
          %s118 = scalar_lea.vmem [#allocation2], %s117
          %s119 = smul.u32 2, %s22
          %s121 = ssub.s32 128, 128
          %122 = vsyncadd %s115, %s121
          %s123 = smul.addr %s21, 2
          %s124 = sadd.s32 %s119, %s123
          %s125 = smul.addr %s20, 8
          %s126 = sadd.s32 %s124, %s125
          %s127 = smul.addr %s126, 16
          %s128 = scalar_lea.hbm %s0, %s127
          %s129 = sshll.u32 %s118, 4
          %s130 = int_to_ptr.vmem [resolvable:$true] %s129
          %135 = dma.hbm_to_vmem [thread:$0]  %s128, 128, %s130, %s115, 32, 32, 2
        $region20: #{tpu_custom_call.1} parent=15 // pred_fallthru
          _
      $region16: #{tpu_custom_call.1} parent=5 // pred_fallthru
        _
      %p136 = scmp.le.s32.totalorder 1, %s13
      %p137 = scmp.lt.s32.totalorder %s13, 3
      %p138 = pnand %p136, %p137
      %p139 = pneg %p138
      // Predicated region
      $region21: #{tpu_custom_call.1} parent=5 // pred_check
        _
      $region22: #{tpu_custom_call.1} parent=5 // pred_check_branch
        %141 = sbr.rel (%p138) target = $region24
      $region23: #{tpu_custom_call.1} parent=5 // pred_region
        %s142 = ssub.s32 %s13, 1
        %s143 = sand.u32 %s49, 1
        %s144 = scalar_lea.sflag [#allocation3], %s143
        %s145 = sand.u32 %s49, 1
        %s146 = smul.addr %s145, 8
        %s147 = scalar_lea.vmem [#allocation2], %s146
        // Predicated region
        $region25: #{tpu_custom_call.1} parent=23 // pred_check
          %p148 = pneg %p62
        $region26: #{tpu_custom_call.1} parent=23 // pred_check_branch
          %150 = sbr.rel (%p148) target = $region28
        $region27: #{tpu_custom_call.1} parent=23 // pred_region
          %151 = dma.done %s144, 128
        $region28: #{tpu_custom_call.1} parent=23 // pred_fallthru
          _
        %s152 = sand.u32 %s49, 1
        %s153 = scalar_lea.sflag [#allocation3], %s152
        %s154 = sand.u32 %s49, 1
        %s155 = smul.addr %s154, 8
        %s156 = scalar_lea.vmem [#allocation2], %s155
        %p157 = pneg %p62
        %p158 = pneg %p59
        %p159 = pneg %p92
        %p160 = pneg %p89
        %s161 = sand.u32 %s79, 1
        %s162 = scalar_lea.sflag [#allocation4], %s161
        %s163 = sand.u32 %s79, 1
        %s164 = smul.addr %s163, 6
        %s165 = scalar_lea.vmem [#allocation5], %s164
        %s166 = smul.u32 2, %s25
        %s167 = smul.u32 2, %s25
        %s168 = scalar_lea.vmem %s147, 6 [#allocation2]
        %v169 = vld [vmem:[%s168] sm:$0x3]
        %v170 = vsub.f32 1.0, %v169
        %v171 = vld [vmem:[%s147] sm:$0x3]
        %v172 = vmul.f32 %v171, %v169
        %v173 = vmul.f32 %v170, 0.25
        %v174 = vadd.f32 %v172, %v173
        %v175 = vlaneseq
        %vm176 = vcmp.ge.s32.totalorder %v175, 0
        %vm177 = vcmp.lt.s32.totalorder %v175, 256
        %vm178 = vmand %vm176, %vm177
        %179 = vst.msk [vmem:[%s165] sm:$0x3] %vm178, %v174
        %s180 = scalar_lea.vmem %s147, 2 [#allocation2]
        %v181 = vld [vmem:[%s180] sm:$0x3]
        %v182 = vmul.f32 %v181, %v169
        %v183 = vmul.f32 %v170, 0.5
        %v184 = vadd.f32 %v182, %v183
        %s185 = scalar_lea.vmem %s165, 2 [#allocation5]
        %186 = vst.msk [vmem:[%s185] sm:$0x3] %vm178, %v184
        %s187 = scalar_lea.vmem %s147, 4 [#allocation2]
        %v188 = vld [vmem:[%s187] sm:$0x3]
        %v189 = vmul.f32 %v188, %v169
        %v190 = vmul.f32 %v170, 0.75
        %v191 = vadd.f32 %v189, %v190
        %s192 = scalar_lea.vmem %s165, 4 [#allocation5]
        %193 = vst.msk [vmem:[%s192] sm:$0x3] %vm178, %v191
        %s194 = sand.u32 %s79, 1
        %s195 = scalar_lea.sflag [#allocation4], %s194
        %s196 = sand.u32 %s79, 1
        %s197 = smul.addr %s196, 6
        %s198 = scalar_lea.vmem [#allocation5], %s197
        // Predicated region
        $region29: #{tpu_custom_call.1} parent=23 // pred_check
          %p199 = pneg %p89
        $region30: #{tpu_custom_call.1} parent=23 // pred_check_branch
          %201 = sbr.rel (%p199) target = $region32
        $region31: #{tpu_custom_call.1} parent=23 // pred_region
          %s202 = smul.u32 2, %s25
          %s204 = ssub.s32 96, 96
          %205 = vsyncadd %s195, %s204
          %s206 = smul.addr %s24, 2
          %s207 = sadd.s32 %s202, %s206
          %s208 = smul.addr %s23, 6
          %s209 = sadd.s32 %s207, %s208
          %s210 = smul.addr %s209, 16
          %s211 = scalar_lea.hbm %s1, %s210
          %s212 = sshll.u32 %s198, 4
          %s213 = int_to_ptr.vmem [resolvable:$true] %s212
          %218 = dma.vmem_to_hbm [thread:$0]  %s213, 96, %s211, %s195, 32, 32, 2
        $region32: #{tpu_custom_call.1} parent=23 // pred_fallthru
          _
      $region24: #{tpu_custom_call.1} parent=5 // pred_fallthru
        _
      %p219 = scmp.le.s32.totalorder 2, %s13
      // Predicated region
      $region33: #{tpu_custom_call.1} parent=5 // pred_check
        %p220 = pneg %p219
      $region34: #{tpu_custom_call.1} parent=5 // pred_check_branch
        %222 = sbr.rel (%p220) target = $region36
      $region35: #{tpu_custom_call.1} parent=5 // pred_region
        %s223 = ssub.s32 %s13, 2
        // Predicated region
        $region37: #{tpu_custom_call.1} parent=35 // pred_check
          %p224 = pneg %p95
        $region38: #{tpu_custom_call.1} parent=35 // pred_check_branch
          %226 = sbr.rel (%p224) target = $region40
        $region39: #{tpu_custom_call.1} parent=35 // pred_region
          %s227 = sand.u32 %s80, 1
          %s228 = scalar_lea.sflag [#allocation4], %s227
          %s229 = sand.u32 %s80, 1
          %s230 = smul.addr %s229, 6
          %s231 = scalar_lea.vmem [#allocation5], %s230
          %232 = dma.done %s228, 96
        $region40: #{tpu_custom_call.1} parent=35 // pred_fallthru
          _
      $region36: #{tpu_custom_call.1} parent=5 // pred_fallthru
        _
    $region6: #{tpu_custom_call.1} parent=1 // loop_footer
      %s17 = sadd.s32 1, %s13
    $region7: #{tpu_custom_call.1} parent=1 // loop_footer_branch
      %12 = sbr.rel target = $region3
    $region8: #{tpu_custom_call.1} parent=1 // loop_exit
      _
    %233 = vsyncpa [#allocation3], 1
    %s234 = scalar_lea.sflag [#allocation3], 1
    %235 = vsyncpa %s234, 1
    %236 = vsyncpa [#allocation4], 1
    %s237 = scalar_lea.sflag [#allocation4], 1
    %238 = vsyncpa %s237, 1

</llo_original>
